<compile_context>
chip_gen: v7x
topology: tpu7x:2x2x1
jax: 0.10.0
libtpu: 0.0.40
codegen_flags: <defaults>
</compile_context>

<pallas_src>
import jax
import jax.numpy as jnp
from jax.experimental import pallas as pl
from jax.experimental.pallas import tpu as pltpu

LANE = 128


def mlp_kernel(x_ref, w1_ref, b1_ref, w2_ref, b2_ref, w3_ref, b3_ref,
               w4_ref, b4_ref, out_ref):
    # MXU matmuls on bf16 operands with f32 accumulation; elementwise in f32.
    h = jnp.dot(x_ref[...], w1_ref[...], preferred_element_type=jnp.float32)
    h = jnp.maximum(h + b1_ref[...], 0.0)

    h = jnp.dot(h.astype(jnp.bfloat16), w2_ref[...],
                preferred_element_type=jnp.float32)
    h = jnp.maximum(h + b2_ref[...], 0.0)

    h = jnp.dot(h.astype(jnp.bfloat16), w3_ref[...],
                preferred_element_type=jnp.float32)
    h = jnp.maximum(h + b3_ref[...], 0.0)

    h = jnp.dot(h.astype(jnp.bfloat16), w4_ref[...],
                preferred_element_type=jnp.float32)
    out_ref[...] = jax.nn.sigmoid(h + b4_ref[...]).astype(out_ref.dtype)


def _round_up(n, m):
    return ((n + m - 1) // m) * m


def _pad2d(a, rows, cols):
    r, c = a.shape
    return jnp.pad(a, ((0, rows - r), (0, cols - c)))


def mlp_forward(x, params, *, tile_m=256):
    """x: [B, in_features] float32. params: (in,out)-layout f32 weights + (1,dim) f32 biases."""
    B, in_features = x.shape
    out_features = params["w4"].shape[1]

    # Lane-dense zero padding of the narrow tail layers (exact: pad cols of h3
    # are ReLU(0+0)=0 and pad rows of w4 are 0, so real outputs are unchanged).
    h3 = _round_up(params["w3"].shape[1], LANE)     # 32 -> 128
    n_out = _round_up(out_features, LANE)           # 16 -> 128
    w3 = _pad2d(params["w3"], params["w3"].shape[0], h3)
    b3 = _pad2d(params["b3"], 1, h3)
    w4 = _pad2d(params["w4"], h3, n_out)
    b4 = _pad2d(params["b4"], 1, n_out)

    # bf16 matmul operands; biases stay f32 for the f32 VPU/EUP epilogue.
    x_bf = x.astype(jnp.bfloat16)
    w1 = params["w1"].astype(jnp.bfloat16)
    w2 = params["w2"].astype(jnp.bfloat16)
    w3 = w3.astype(jnp.bfloat16)
    w4 = w4.astype(jnp.bfloat16)
    b1, b2 = params["b1"], params["b2"]

    # Batch tile: multiple of 8, as large as requested but no larger than the
    # (sublane-rounded) batch. Ragged last block is read-padded / write-clipped.
    tile_m = max(8, min(_round_up(tile_m, 8), _round_up(B, 8)))
    grid = (pl.cdiv(B, tile_m),)

    def resident(shape):
        # Constant block index -> fetched once, kept resident across the grid.
        return pl.BlockSpec(shape, lambda i: (0, 0))

    flops = 2 * B * (in_features * 256 + 256 * 128 + 128 * h3 + h3 * n_out)
    bytes_accessed = (
        x_bf.size * 2 + B * n_out * 4
        + 2 * (w1.size + w2.size + w3.size + w4.size)
        + 4 * (b1.size + b2.size + b3.size + b4.size))
    cost = pl.CostEstimate(flops=flops, transcendentals=B * n_out,
                           bytes_accessed=bytes_accessed)

    out_padded = pl.pallas_call(
        mlp_kernel,
        out_shape=jax.ShapeDtypeStruct((B, n_out), jnp.float32),
        grid_spec=pltpu.PrefetchScalarGridSpec(
            num_scalar_prefetch=0,
            grid=grid,
            in_specs=[
                pl.BlockSpec((tile_m, in_features), lambda i: (i, 0)),
                resident(w1.shape), resident(b1.shape),
                resident(w2.shape), resident(b2.shape),
                resident(w3.shape), resident(b3.shape),
                resident(w4.shape), resident(b4.shape),
            ],
            out_specs=pl.BlockSpec((tile_m, n_out), lambda i: (i, 0)),
        ),
        compiler_params=pltpu.CompilerParams(
            dimension_semantics=("parallel",)),
        cost_estimate=cost,
    )(x_bf, w1, b1, w2, b2, w3, b3, w4, b4)

    # Strip the lane padding back to the true output width (plain JAX slice).
    return out_padded[:, :out_features]


def init_params(key, in_features, out_features):
    """Deterministic init matching nn.Linear's U(-1/sqrt(fan_in), 1/sqrt(fan_in)).
    Weights stored in (in, out) layout (transpose of PyTorch's (out, in))."""
    dims = [(in_features, 256), (256, 128), (128, 32), (32, out_features)]
    params = {}
    for idx, (fan_in, fan_out) in enumerate(dims, start=1):
        key, kw, kb = jax.random.split(key, 3)
        bound = 1.0 / jnp.sqrt(fan_in)
        params[f"w{idx}"] = jax.random.uniform(
            kw, (fan_in, fan_out), jnp.float32, -bound, bound)
        params[f"b{idx}"] = jax.random.uniform(
            kb, (1, fan_out), jnp.float32, -bound, bound)
    return params


def mlp_reference(x, params):
    """Pure-JAX reference with the same bf16-operand / f32-accumulate numerics."""
    def mm(a, w):
        return jnp.dot(a.astype(jnp.bfloat16), w.astype(jnp.bfloat16),
                       preferred_element_type=jnp.float32)
    h = jnp.maximum(mm(x, params["w1"]) + params["b1"], 0.0)
    h = jnp.maximum(mm(h, params["w2"]) + params["b2"], 0.0)
    h = jnp.maximum(mm(h, params["w3"]) + params["b3"], 0.0)
    return jax.nn.sigmoid(mm(h, params["w4"]) + params["b4"])


if __name__ == "__main__":
    in_features, out_features = 64, 16
    batch = 256          # 2 grid steps at tile_m=128 -> feeds both v7x TCs

    key = jax.random.PRNGKey(0)
    key, kx = jax.random.split(key)
    x = jax.random.normal(kx, (batch, in_features), jnp.float32)
    params = init_params(key, in_features, out_features)

    out = mlp_forward(x, params, tile_m=128)
    out = jax.block_until_ready(out)

    ref = mlp_reference(x, params)
    assert out.shape == (batch, out_features)
    assert jnp.allclose(out, ref, atol=2e-3, rtol=2e-3), "mismatch vs reference"
    print("KERNEL_OK")
</pallas_src>

<mosaic_0001>
module attributes {stable_mosaic.version = 11 : i64} {
  func.func @mlp_kernel(%arg0: i32, %arg1: memref<128x64xbf16, #tpu.memory_space<vmem>>, %arg2: memref<64x256xbf16, #tpu.memory_space<vmem>>, %arg3: memref<1x256xf32, #tpu.memory_space<vmem>>, %arg4: memref<256x128xbf16, #tpu.memory_space<vmem>>, %arg5: memref<1x128xf32, #tpu.memory_space<vmem>>, %arg6: memref<128x128xbf16, #tpu.memory_space<vmem>>, %arg7: memref<1x128xf32, #tpu.memory_space<vmem>>, %arg8: memref<128x128xbf16, #tpu.memory_space<vmem>>, %arg9: memref<1x128xf32, #tpu.memory_space<vmem>>, %arg10: memref<128x128xf32, #tpu.memory_space<vmem>>) attributes {dimension_semantics = [#tpu.dimension_semantics<parallel>], iteration_bounds = array<i64: 2>, scalar_prefetch = 0 : i64, scratch_operands = 0 : i64, tpu.core_type = #tpu.core_type<tc>, window_params = [{transform_indices = @transform_0, window_bounds = array<i64: 128, 64>}, {pipeline_mode = #tpu.pipeline_mode<synchronous>, transform_indices = @transform_1, window_bounds = array<i64: 64, 256>}, {pipeline_mode = #tpu.pipeline_mode<synchronous>, transform_indices = @transform_2, window_bounds = array<i64: 1, 256>}, {pipeline_mode = #tpu.pipeline_mode<synchronous>, transform_indices = @transform_3, window_bounds = array<i64: 256, 128>}, {pipeline_mode = #tpu.pipeline_mode<synchronous>, transform_indices = @transform_4, window_bounds = array<i64: 1, 128>}, {pipeline_mode = #tpu.pipeline_mode<synchronous>, transform_indices = @transform_5, window_bounds = array<i64: 128, 128>}, {pipeline_mode = #tpu.pipeline_mode<synchronous>, transform_indices = @transform_6, window_bounds = array<i64: 1, 128>}, {pipeline_mode = #tpu.pipeline_mode<synchronous>, transform_indices = @transform_7, window_bounds = array<i64: 128, 128>}, {pipeline_mode = #tpu.pipeline_mode<synchronous>, transform_indices = @transform_8, window_bounds = array<i64: 1, 128>}, {transform_indices = @transform_9, window_bounds = array<i64: 128, 128>}]} {
    %c0 = arith.constant 0 : index
    %c0_0 = arith.constant 0 : index
    %0 = vector.load %arg1[%c0, %c0_0] : memref<128x64xbf16, #tpu.memory_space<vmem>>, vector<128x64xbf16>
    %c0_1 = arith.constant 0 : index
    %c0_2 = arith.constant 0 : index
    %1 = vector.load %arg2[%c0_1, %c0_2] : memref<64x256xbf16, #tpu.memory_space<vmem>>, vector<64x256xbf16>
    %cst = arith.constant dense<0.000000e+00> : vector<128x256xf32>
    %2 = tpu.matmul %0, %1, %cst {dimension_numbers = #tpu.dot_dimension_numbers<[1], [0], [0], [1], [0, 0, 1, 1], [], []>} : vector<128x64xbf16>, vector<64x256xbf16>, vector<128x256xf32> -> vector<128x256xf32>
    %c0_3 = arith.constant 0 : index
    %c0_4 = arith.constant 0 : index
    %3 = vector.load %arg3[%c0_3, %c0_4] : memref<1x256xf32, #tpu.memory_space<vmem>>, vector<1x256xf32>
    %4 = vector.broadcast %3 : vector<1x256xf32> to vector<128x256xf32>
    %5 = arith.addf %2, %4 : vector<128x256xf32>
    %cst_5 = arith.constant 0.000000e+00 : f32
    %6 = vector.broadcast %cst_5 : f32 to vector<128x256xf32>
    %7 = arith.maximumf %5, %6 : vector<128x256xf32>
    %8 = arith.truncf %7 : vector<128x256xf32> to vector<128x256xbf16>
    %c0_6 = arith.constant 0 : index
    %c0_7 = arith.constant 0 : index
    %9 = vector.load %arg4[%c0_6, %c0_7] : memref<256x128xbf16, #tpu.memory_space<vmem>>, vector<256x128xbf16>
    %cst_8 = arith.constant dense<0.000000e+00> : vector<128x128xf32>
    %10 = tpu.matmul %8, %9, %cst_8 {dimension_numbers = #tpu.dot_dimension_numbers<[1], [0], [0], [1], [0, 0, 1, 1], [], []>} : vector<128x256xbf16>, vector<256x128xbf16>, vector<128x128xf32> -> vector<128x128xf32>
    %c0_9 = arith.constant 0 : index
    %c0_10 = arith.constant 0 : index
    %11 = vector.load %arg5[%c0_9, %c0_10] : memref<1x128xf32, #tpu.memory_space<vmem>>, vector<1x128xf32>
    %12 = vector.broadcast %11 : vector<1x128xf32> to vector<128x128xf32>
    %13 = arith.addf %10, %12 : vector<128x128xf32>
    %cst_11 = arith.constant 0.000000e+00 : f32
    %14 = vector.broadcast %cst_11 : f32 to vector<128x128xf32>
    %15 = arith.maximumf %13, %14 : vector<128x128xf32>
    %16 = arith.truncf %15 : vector<128x128xf32> to vector<128x128xbf16>
    %c0_12 = arith.constant 0 : index
    %c0_13 = arith.constant 0 : index
    %17 = vector.load %arg6[%c0_12, %c0_13] : memref<128x128xbf16, #tpu.memory_space<vmem>>, vector<128x128xbf16>
    %cst_14 = arith.constant dense<0.000000e+00> : vector<128x128xf32>
    %18 = tpu.matmul %16, %17, %cst_14 {dimension_numbers = #tpu.dot_dimension_numbers<[1], [0], [0], [1], [0, 0, 1, 1], [], []>} : vector<128x128xbf16>, vector<128x128xbf16>, vector<128x128xf32> -> vector<128x128xf32>
    %c0_15 = arith.constant 0 : index
    %c0_16 = arith.constant 0 : index
    %19 = vector.load %arg7[%c0_15, %c0_16] : memref<1x128xf32, #tpu.memory_space<vmem>>, vector<1x128xf32>
    %20 = vector.broadcast %19 : vector<1x128xf32> to vector<128x128xf32>
    %21 = arith.addf %18, %20 : vector<128x128xf32>
    %cst_17 = arith.constant 0.000000e+00 : f32
    %22 = vector.broadcast %cst_17 : f32 to vector<128x128xf32>
    %23 = arith.maximumf %21, %22 : vector<128x128xf32>
    %24 = arith.truncf %23 : vector<128x128xf32> to vector<128x128xbf16>
    %c0_18 = arith.constant 0 : index
    %c0_19 = arith.constant 0 : index
    %25 = vector.load %arg8[%c0_18, %c0_19] : memref<128x128xbf16, #tpu.memory_space<vmem>>, vector<128x128xbf16>
    %cst_20 = arith.constant dense<0.000000e+00> : vector<128x128xf32>
    %26 = tpu.matmul %24, %25, %cst_20 {dimension_numbers = #tpu.dot_dimension_numbers<[1], [0], [0], [1], [0, 0, 1, 1], [], []>} : vector<128x128xbf16>, vector<128x128xbf16>, vector<128x128xf32> -> vector<128x128xf32>
    %c0_21 = arith.constant 0 : index
    %c0_22 = arith.constant 0 : index
    %27 = vector.load %arg9[%c0_21, %c0_22] : memref<1x128xf32, #tpu.memory_space<vmem>>, vector<1x128xf32>
    %28 = vector.broadcast %27 : vector<1x128xf32> to vector<128x128xf32>
    %29 = arith.addf %26, %28 : vector<128x128xf32>
    %30 = arith.negf %29 : vector<128x128xf32>
    %31 = math.exp %30 : vector<128x128xf32>
    %cst_23 = arith.constant 1.000000e+00 : f32
    %32 = vector.broadcast %cst_23 : f32 to vector<128x128xf32>
    %33 = arith.addf %32, %31 : vector<128x128xf32>
    %34 = arith.divf %32, %33 : vector<128x128xf32>
    %c0_24 = arith.constant 0 : index
    %c0_25 = arith.constant 0 : index
    %35 = vector.load %arg10[%c0_24, %c0_25] : memref<128x128xf32, #tpu.memory_space<vmem>>, vector<128x128xf32>
    tpu.vector_store %arg10[%c0_24, %c0_25], %34 {strides = array<i32>} : memref<128x128xf32, #tpu.memory_space<vmem>>, vector<128x128xf32>,
    return
  }
  func.func @transform_0(%arg0: i32) -> (i32, i32) {
    %c0_i32 = arith.constant 0 : i32
    %c0_i32_0 = arith.constant 0 : i32
    return %arg0, %c0_i32 : i32, i32
  }
  func.func @transform_1(%arg0: i32) -> (i32, i32) {
    %c0_i32 = arith.constant 0 : i32
    %c0_i32_0 = arith.constant 0 : i32
    %c0_i32_1 = arith.constant 0 : i32
    return %c0_i32, %c0_i32_0 : i32, i32
  }
  func.func @transform_2(%arg0: i32) -> (i32, i32) {
    %c0_i32 = arith.constant 0 : i32
    %c0_i32_0 = arith.constant 0 : i32
    %c0_i32_1 = arith.constant 0 : i32
    return %c0_i32, %c0_i32_0 : i32, i32
  }
  func.func @transform_3(%arg0: i32) -> (i32, i32) {
    %c0_i32 = arith.constant 0 : i32
    %c0_i32_0 = arith.constant 0 : i32
    %c0_i32_1 = arith.constant 0 : i32
    return %c0_i32, %c0_i32_0 : i32, i32
  }
  func.func @transform_4(%arg0: i32) -> (i32, i32) {
    %c0_i32 = arith.constant 0 : i32
    %c0_i32_0 = arith.constant 0 : i32
    %c0_i32_1 = arith.constant 0 : i32
    return %c0_i32, %c0_i32_0 : i32, i32
  }
  func.func @transform_5(%arg0: i32) -> (i32, i32) {
    %c0_i32 = arith.constant 0 : i32
    %c0_i32_0 = arith.constant 0 : i32
    %c0_i32_1 = arith.constant 0 : i32
    return %c0_i32, %c0_i32_0 : i32, i32
  }
  func.func @transform_6(%arg0: i32) -> (i32, i32) {
    %c0_i32 = arith.constant 0 : i32
    %c0_i32_0 = arith.constant 0 : i32
    %c0_i32_1 = arith.constant 0 : i32
    return %c0_i32, %c0_i32_0 : i32, i32
  }
  func.func @transform_7(%arg0: i32) -> (i32, i32) {
    %c0_i32 = arith.constant 0 : i32
    %c0_i32_0 = arith.constant 0 : i32
    %c0_i32_1 = arith.constant 0 : i32
    return %c0_i32, %c0_i32_0 : i32, i32
  }
  func.func @transform_8(%arg0: i32) -> (i32, i32) {
    %c0_i32 = arith.constant 0 : i32
    %c0_i32_0 = arith.constant 0 : i32
    %c0_i32_1 = arith.constant 0 : i32
    return %c0_i32, %c0_i32_0 : i32, i32
  }
  func.func @transform_9(%arg0: i32) -> (i32, i32) {
    %c0_i32 = arith.constant 0 : i32
    %c0_i32_0 = arith.constant 0 : i32
    return %arg0, %c0_i32 : i32, i32
  }
}

</mosaic_0001>

<llo_original>
// kernel: tpu_custom_call.1
$region0: #{tpu_custom_call.1}
  #allocation0 [shape = 'u32[]', space=smem, size = 0x4, offset = 0x4, fixed_abs, tag = 'smem constant byte address 0x4 - core index']
  #allocation1 [shape = 'u32[144,128]{1,0:T(1,128)}', space=vmem, size = 0x12000, scoped, tag = 'internal scratch']
  %s0 = inlined_call_operand.vmem [shape: bf16[256,64], index: 0, kind: input, shape index: {}]
  %s1 = inlined_call_operand.vmem [shape: bf16[64,256], index: 1, kind: input, shape index: {}]
  %s2 = inlined_call_operand.vmem [shape: f32[1,256], index: 2, kind: input, shape index: {}]
  %s3 = inlined_call_operand.vmem [shape: bf16[256,128], index: 3, kind: input, shape index: {}]
  %s4 = inlined_call_operand.vmem [shape: f32[1,128], index: 4, kind: input, shape index: {}]
  %s5 = inlined_call_operand.hbm [shape: bf16[128,128], index: 5, kind: input, shape index: {}]
  %s6 = inlined_call_operand.vmem [shape: f32[1,128], index: 6, kind: input, shape index: {}]
  %s7 = inlined_call_operand.hbm [shape: bf16[128,128], index: 7, kind: input, shape index: {}]
  %s8 = inlined_call_operand.vmem [shape: f32[1,128], index: 8, kind: input, shape index: {}]
  %s9 = inlined_call_operand.hbm [shape: f32[256,128], index: 9, kind: output, shape index: {}]
  %s10 = sld [smem:[#allocation0]]
  $region77: #{tpu_custom_call.1} parent=0
    _
  %s12 = ssub.s32 1, %s10
  %s13 = scalar_select 0, %s12, %s10
  $region1: #{tpu_custom_call.1} parent=0
    #allocation2 [shape = 'u8[32768]{0}', space=vmem, size = 0x8000, scoped, tag = 'input window, operand 5, single buffered']
    #allocation3 [shape = 's32[2]{0}', space=sflag, size = 0x8, scoped, tag = 'scoped memory for tpu_custom_call.1']
    #allocation4 [shape = 's32[2]{0}', space=sflag, size = 0x8, scoped, tag = 'scoped memory for tpu_custom_call.1']
    #allocation5 [shape = 'u8[32768]{0}', space=vmem, size = 0x8000, scoped, tag = 'input window, operand 7, single buffered']
    #allocation6 [shape = 's32[1]{0}', space=sflag, size = 0x4, scoped, tag = 'scoped memory for tpu_custom_call.1']
    #allocation7 [shape = 'u8[131072]{0}', space=vmem, size = 0x20000, scoped, tag = 'output window, operand 0']
    %14 = vsyncpa [#allocation3], 0
    %15 = vsyncpa [#allocation6], 0
    %16 = vsyncpa [#allocation4], 0
    %s17 = scalar_lea.sflag [#allocation4], 1
    %18 = vsyncpa %s17, 0
    loop: start=0, step=1, limit=4
    $region2: #{tpu_custom_call.1} parent=1 // loop_pre_header
      _
    $region3: #{tpu_custom_call.1} parent=1 // loop_header
      %s20 = sphi 0, %s24
      %p21 = scmp.ge.s32.totalorder %s20, 4
      %s30 = sphi 0, %s32
      %s33 = sphi 0, %s30
      %s34 = sphi 0, %s33
      %s50 = sphi 0, %s34
      %s54 = sphi 0, %s54
      %s56 = sphi 0, %s54
      %s57 = sphi 0, %s56
      %s71 = sphi 0, %s57
      %s75 = sphi 0, %s75
      %s77 = sphi 0, %s75
      %s78 = sphi 0, %s77
      %s92 = sphi 0, %s78
      %s96 = sphi 0, %s96
      %s98 = sphi 0, %s96
      %s99 = sphi 0, %s98
      %s113 = sphi 0, %s99
      %s117 = sphi 0, %s117
      %s119 = sphi 0, %s117
      %s120 = sphi 0, %s119
      %s134 = sphi 0, %s120
      %s138 = sphi 0, %s138
      %s140 = sphi 0, %s138
      %s141 = sphi 0, %s140
      %s155 = sphi 0, %s141
      %s159 = sphi 0, %s159
      %s161 = sphi 0, %s159
      %s162 = sphi 0, %s161
      %s176 = sphi 0, %s162
      %s180 = sphi 0, %s180
      %s182 = sphi 0, %s180
      %s183 = sphi 0, %s182
      %s197 = sphi 0, %s183
      %s201 = sphi 0, %s201
      %s203 = sphi 0, %s201
      %s204 = sphi 0, %s203
      %s218 = sphi 0, %s204
      %s224 = sphi 0, %s226
      %s227 = sphi 0, %s224
      %s228 = sphi 0, %s227
      %s244 = sphi 0, %s228
    $region4: #{tpu_custom_call.1} parent=1 // loop_header_branch
      %23 = sbr.rel (%p21) target = $region8
    $region5: #{tpu_custom_call.1} parent=1 // loop_body
      %s25 = ssub.s32 %s20, 1
      %s26 = ssub.s32 %s20, 2
      %s27 = sadd.s32 %s20, 1
      %s28 = ssub.s32 %s20, %s27
      %p29 = scmp.eq.s32.totalorder %s28, 0
      %s31 = sadd.s32 %s30, 1
      %s32 = scalar_select %p29, %s30, %s31
      %p35 = pneg %p29
      %p36 = scmp.eq.s32.totalorder %s20, 1
      %p37 = por %p35, %p36
      %p38 = scmp.ne.s32.totalorder %s30, %s33
      %p39 = scmp.eq.s32.totalorder %s20, 0
      %p40 = por %p38, %p39
      %p41 = scmp.ne.s32.totalorder %s30, %s33
      %p42 = scmp.eq.s32.totalorder %s25, 1
      %p43 = por %p41, %p42
      %p44 = scmp.ne.s32.totalorder %s33, %s34
      %p45 = scmp.eq.s32.totalorder %s25, 0
      %p46 = por %p44, %p45
      %p47 = scmp.ne.s32.totalorder %s33, %s34
      %p48 = scmp.eq.s32.totalorder %s26, 1
      %p49 = por %p47, %p48
      %p51 = scmp.ne.s32.totalorder %s34, %s50
      %p52 = scmp.eq.s32.totalorder %s26, 0
      %p53 = por %p51, %p52
      %s55 = sadd.s32 %s54, 1
      %p58 = scmp.eq.s32.totalorder %s20, 1
      %p59 = scmp.ne.s32.totalorder %s54, %s56
      %p60 = scmp.eq.s32.totalorder %s20, 0
      %p61 = por %p59, %p60
      %p62 = scmp.ne.s32.totalorder %s54, %s56
      %p63 = scmp.eq.s32.totalorder %s25, 1
      %p64 = por %p62, %p63
      %p65 = scmp.ne.s32.totalorder %s56, %s57
      %p66 = scmp.eq.s32.totalorder %s25, 0
      %p67 = por %p65, %p66
      %p68 = scmp.ne.s32.totalorder %s56, %s57
      %p69 = scmp.eq.s32.totalorder %s26, 1
      %p70 = por %p68, %p69
      %p72 = scmp.ne.s32.totalorder %s57, %s71
      %p73 = scmp.eq.s32.totalorder %s26, 0
      %p74 = por %p72, %p73
      %s76 = sadd.s32 %s75, 1
      %p79 = scmp.eq.s32.totalorder %s20, 1
      %p80 = scmp.ne.s32.totalorder %s75, %s77
      %p81 = scmp.eq.s32.totalorder %s20, 0
      %p82 = por %p80, %p81
      %p83 = scmp.ne.s32.totalorder %s75, %s77
      %p84 = scmp.eq.s32.totalorder %s25, 1
      %p85 = por %p83, %p84
      %p86 = scmp.ne.s32.totalorder %s77, %s78
      %p87 = scmp.eq.s32.totalorder %s25, 0
      %p88 = por %p86, %p87
      %p89 = scmp.ne.s32.totalorder %s77, %s78
      %p90 = scmp.eq.s32.totalorder %s26, 1
      %p91 = por %p89, %p90
      %p93 = scmp.ne.s32.totalorder %s78, %s92
      %p94 = scmp.eq.s32.totalorder %s26, 0
      %p95 = por %p93, %p94
      %s97 = sadd.s32 %s96, 1
      %p100 = scmp.eq.s32.totalorder %s20, 1
      %p101 = scmp.ne.s32.totalorder %s96, %s98
      %p102 = scmp.eq.s32.totalorder %s20, 0
      %p103 = por %p101, %p102
      %p104 = scmp.ne.s32.totalorder %s96, %s98
      %p105 = scmp.eq.s32.totalorder %s25, 1
      %p106 = por %p104, %p105
      %p107 = scmp.ne.s32.totalorder %s98, %s99
      %p108 = scmp.eq.s32.totalorder %s25, 0
      %p109 = por %p107, %p108
      %p110 = scmp.ne.s32.totalorder %s98, %s99
      %p111 = scmp.eq.s32.totalorder %s26, 1
      %p112 = por %p110, %p111
      %p114 = scmp.ne.s32.totalorder %s99, %s113
      %p115 = scmp.eq.s32.totalorder %s26, 0
      %p116 = por %p114, %p115
      %s118 = sadd.s32 %s117, 1
      %p121 = scmp.eq.s32.totalorder %s20, 1
      %p122 = scmp.ne.s32.totalorder %s117, %s119
      %p123 = scmp.eq.s32.totalorder %s20, 0
      %p124 = por %p122, %p123
      %p125 = scmp.ne.s32.totalorder %s117, %s119
      %p126 = scmp.eq.s32.totalorder %s25, 1
      %p127 = por %p125, %p126
      %p128 = scmp.ne.s32.totalorder %s119, %s120
      %p129 = scmp.eq.s32.totalorder %s25, 0
      %p130 = por %p128, %p129
      %p131 = scmp.ne.s32.totalorder %s119, %s120
      %p132 = scmp.eq.s32.totalorder %s26, 1
      %p133 = por %p131, %p132
      %p135 = scmp.ne.s32.totalorder %s120, %s134
      %p136 = scmp.eq.s32.totalorder %s26, 0
      %p137 = por %p135, %p136
      %s139 = sadd.s32 %s138, 1
      %p142 = scmp.eq.s32.totalorder %s20, 1
      %p143 = scmp.ne.s32.totalorder %s138, %s140
      %p144 = scmp.eq.s32.totalorder %s20, 0
      %p145 = por %p143, %p144
      %p146 = scmp.ne.s32.totalorder %s138, %s140
      %p147 = scmp.eq.s32.totalorder %s25, 1
      %p148 = por %p146, %p147
      %p149 = scmp.ne.s32.totalorder %s140, %s141
      %p150 = scmp.eq.s32.totalorder %s25, 0
      %p151 = por %p149, %p150
      %p152 = scmp.ne.s32.totalorder %s140, %s141
      %p153 = scmp.eq.s32.totalorder %s26, 1
      %p154 = por %p152, %p153
      %p156 = scmp.ne.s32.totalorder %s141, %s155
      %p157 = scmp.eq.s32.totalorder %s26, 0
      %p158 = por %p156, %p157
      %s160 = sadd.s32 %s159, 1
      %p163 = scmp.eq.s32.totalorder %s20, 1
      %p164 = scmp.ne.s32.totalorder %s159, %s161
      %p165 = scmp.eq.s32.totalorder %s20, 0
      %p166 = por %p164, %p165
      %p167 = scmp.ne.s32.totalorder %s159, %s161
      %p168 = scmp.eq.s32.totalorder %s25, 1
      %p169 = por %p167, %p168
      %p170 = scmp.ne.s32.totalorder %s161, %s162
      %p171 = scmp.eq.s32.totalorder %s25, 0
      %p172 = por %p170, %p171
      %p173 = scmp.ne.s32.totalorder %s161, %s162
      %p174 = scmp.eq.s32.totalorder %s26, 1
      %p175 = por %p173, %p174
      %p177 = scmp.ne.s32.totalorder %s162, %s176
      %p178 = scmp.eq.s32.totalorder %s26, 0
      %p179 = por %p177, %p178
      %s181 = sadd.s32 %s180, 1
      %p184 = scmp.eq.s32.totalorder %s20, 1
      %p185 = scmp.ne.s32.totalorder %s180, %s182
      %p186 = scmp.eq.s32.totalorder %s20, 0
      %p187 = por %p185, %p186
      %p188 = scmp.ne.s32.totalorder %s180, %s182
      %p189 = scmp.eq.s32.totalorder %s25, 1
      %p190 = por %p188, %p189
      %p191 = scmp.ne.s32.totalorder %s182, %s183
      %p192 = scmp.eq.s32.totalorder %s25, 0
      %p193 = por %p191, %p192
      %p194 = scmp.ne.s32.totalorder %s182, %s183
      %p195 = scmp.eq.s32.totalorder %s26, 1
      %p196 = por %p194, %p195
      %p198 = scmp.ne.s32.totalorder %s183, %s197
      %p199 = scmp.eq.s32.totalorder %s26, 0
      %p200 = por %p198, %p199
      %s202 = sadd.s32 %s201, 1
      %p205 = scmp.eq.s32.totalorder %s20, 1
      %p206 = scmp.ne.s32.totalorder %s201, %s203
      %p207 = scmp.eq.s32.totalorder %s20, 0
      %p208 = por %p206, %p207
      %p209 = scmp.ne.s32.totalorder %s201, %s203
      %p210 = scmp.eq.s32.totalorder %s25, 1
      %p211 = por %p209, %p210
      %p212 = scmp.ne.s32.totalorder %s203, %s204
      %p213 = scmp.eq.s32.totalorder %s25, 0
      %p214 = por %p212, %p213
      %p215 = scmp.ne.s32.totalorder %s203, %s204
      %p216 = scmp.eq.s32.totalorder %s26, 1
      %p217 = por %p215, %p216
      %p219 = scmp.ne.s32.totalorder %s204, %s218
      %p220 = scmp.eq.s32.totalorder %s26, 0
      %p221 = por %p219, %p220
      %s222 = ssub.s32 %s20, %s27
      %p223 = scmp.eq.s32.totalorder %s222, 0
      %s225 = sadd.s32 %s224, 1
      %s226 = scalar_select %p223, %s224, %s225
      %p229 = pneg %p223
      %p230 = scmp.eq.s32.totalorder %s20, 1
      %p231 = por %p229, %p230
      %p232 = scmp.ne.s32.totalorder %s224, %s227
      %p233 = scmp.eq.s32.totalorder %s20, 0
      %p234 = por %p232, %p233
      %p235 = scmp.ne.s32.totalorder %s224, %s227
      %p236 = scmp.eq.s32.totalorder %s25, 1
      %p237 = por %p235, %p236
      %p238 = scmp.ne.s32.totalorder %s227, %s228
      %p239 = scmp.eq.s32.totalorder %s25, 0
      %p240 = por %p238, %p239
      %p241 = scmp.ne.s32.totalorder %s227, %s228
      %p242 = scmp.eq.s32.totalorder %s26, 1
      %p243 = por %p241, %p242
      %p245 = scmp.ne.s32.totalorder %s228, %s244
      %p246 = scmp.eq.s32.totalorder %s26, 0
      %p247 = por %p245, %p246
      %p248 = scmp.le.s32.totalorder 1, %s20
      %p249 = scmp.lt.s32.totalorder %s20, 3
      %p250 = pnand %p248, %p249
      %p251 = pneg %p250
      // Predicated region
      $region9: #{tpu_custom_call.1} parent=5 // pred_check
        _
      $region10: #{tpu_custom_call.1} parent=5 // pred_check_branch
        %253 = sbr.rel (%p250) target = $region12
      $region11: #{tpu_custom_call.1} parent=5 // pred_region
        %s254 = ssub.s32 %s20, 1
        // Predicated region
        $region13: #{tpu_custom_call.1} parent=11 // pred_check
          %p255 = pneg %p67
        $region14: #{tpu_custom_call.1} parent=11 // pred_check_branch
          %257 = sbr.rel (%p255) target = $region16
        $region15: #{tpu_custom_call.1} parent=11 // pred_region
          _
        $region16: #{tpu_custom_call.1} parent=11 // pred_fallthru
          _
        // Predicated region
        $region17: #{tpu_custom_call.1} parent=11 // pred_check
          %p258 = pneg %p88
        $region18: #{tpu_custom_call.1} parent=11 // pred_check_branch
          %260 = sbr.rel (%p258) target = $region20
        $region19: #{tpu_custom_call.1} parent=11 // pred_region
          _
        $region20: #{tpu_custom_call.1} parent=11 // pred_fallthru
          _
        // Predicated region
        $region21: #{tpu_custom_call.1} parent=11 // pred_check
          %p261 = pneg %p109
        $region22: #{tpu_custom_call.1} parent=11 // pred_check_branch
          %263 = sbr.rel (%p261) target = $region24
        $region23: #{tpu_custom_call.1} parent=11 // pred_region
          _
        $region24: #{tpu_custom_call.1} parent=11 // pred_fallthru
          _
        // Predicated region
        $region25: #{tpu_custom_call.1} parent=11 // pred_check
          %p264 = pneg %p130
        $region26: #{tpu_custom_call.1} parent=11 // pred_check_branch
          %266 = sbr.rel (%p264) target = $region28
        $region27: #{tpu_custom_call.1} parent=11 // pred_region
          _
        $region28: #{tpu_custom_call.1} parent=11 // pred_fallthru
          _
        // Predicated region
        $region29: #{tpu_custom_call.1} parent=11 // pred_check
          %p267 = pneg %p151
        $region30: #{tpu_custom_call.1} parent=11 // pred_check_branch
          %269 = sbr.rel (%p267) target = $region32
        $region31: #{tpu_custom_call.1} parent=11 // pred_region
          %s271 = ssub.s32 1024, 1024
          %272 = vsyncadd [#allocation3], %s271
          %s273 = sshll.u32 [#allocation2], 4
          %s274 = int_to_ptr.vmem [resolvable:$true] %s273
          %279 = dma.hbm_to_vmem [thread:$0]  %s5, 1024, %s274, [#allocation3], 64, 64, 4
        $region32: #{tpu_custom_call.1} parent=11 // pred_fallthru
          _
        // Predicated region
        $region33: #{tpu_custom_call.1} parent=11 // pred_check
          %p280 = pneg %p172
        $region34: #{tpu_custom_call.1} parent=11 // pred_check_branch
          %282 = sbr.rel (%p280) target = $region36
        $region35: #{tpu_custom_call.1} parent=11 // pred_region
          _
        $region36: #{tpu_custom_call.1} parent=11 // pred_fallthru
          _
        // Predicated region
        $region37: #{tpu_custom_call.1} parent=11 // pred_check
          %p283 = pneg %p193
        $region38: #{tpu_custom_call.1} parent=11 // pred_check_branch
          %285 = sbr.rel (%p283) target = $region40
        $region39: #{tpu_custom_call.1} parent=11 // pred_region
          %s287 = ssub.s32 1024, 1024
          %288 = vsyncadd [#allocation6], %s287
          %s289 = sshll.u32 [#allocation5], 4
          %s290 = int_to_ptr.vmem [resolvable:$true] %s289
          %295 = dma.hbm_to_vmem [thread:$0]  %s7, 1024, %s290, [#allocation6], 64, 64, 4
        $region40: #{tpu_custom_call.1} parent=11 // pred_fallthru
          _
        // Predicated region
        $region41: #{tpu_custom_call.1} parent=11 // pred_check
          %p296 = pneg %p214
        $region42: #{tpu_custom_call.1} parent=11 // pred_check_branch
          %298 = sbr.rel (%p296) target = $region44
        $region43: #{tpu_custom_call.1} parent=11 // pred_region
          _
        $region44: #{tpu_custom_call.1} parent=11 // pred_fallthru
          _
      $region12: #{tpu_custom_call.1} parent=5 // pred_fallthru
        _
      %p299 = scmp.lt.s32.totalorder %s20, 2
      // Predicated region
      $region45: #{tpu_custom_call.1} parent=5 // pred_check
        %p300 = pneg %p299
      $region46: #{tpu_custom_call.1} parent=5 // pred_check_branch
        %302 = sbr.rel (%p300) target = $region48
      $region47: #{tpu_custom_call.1} parent=5 // pred_region
        // Predicated region
        $region49: #{tpu_custom_call.1} parent=47 // pred_check
          %p303 = pneg %p40
        $region50: #{tpu_custom_call.1} parent=47 // pred_check_branch
          %305 = sbr.rel (%p303) target = $region52
        $region51: #{tpu_custom_call.1} parent=47 // pred_region
          %s306 = smul.u32 16, %s20
          %p307 = scmp.lt.s32.totalorder %s306, 31
          %s308 = scalar_select %p307, %s306, 31
          %s309 = smul.addr %s308, 4
          %s310 = scalar_lea.vmem %s0, %s309
          %s311 = smul.u32 16, %s20
        $region52: #{tpu_custom_call.1} parent=47 // pred_fallthru
          _
      $region48: #{tpu_custom_call.1} parent=5 // pred_fallthru
        _
      %p312 = scmp.le.s32.totalorder 1, %s20
      %p313 = scmp.lt.s32.totalorder %s20, 3
      %p314 = pnand %p312, %p313
      %p315 = pneg %p314
      // Predicated region
      $region53: #{tpu_custom_call.1} parent=5 // pred_check
        _
      $region54: #{tpu_custom_call.1} parent=5 // pred_check_branch
        %317 = sbr.rel (%p314) target = $region56
      $region55: #{tpu_custom_call.1} parent=5 // pred_region
        %s318 = ssub.s32 %s20, 1
        // Predicated region
        $region57: #{tpu_custom_call.1} parent=55 // pred_check
          %p319 = pneg %p151
        $region58: #{tpu_custom_call.1} parent=55 // pred_check_branch
          %321 = sbr.rel (%p319) target = $region60
        $region59: #{tpu_custom_call.1} parent=55 // pred_region
          %322 = dma.done [#allocation3], 1024
        $region60: #{tpu_custom_call.1} parent=55 // pred_fallthru
          _
        // Predicated region
        $region61: #{tpu_custom_call.1} parent=55 // pred_check
          %p323 = pneg %p193
        $region62: #{tpu_custom_call.1} parent=55 // pred_check_branch
          %325 = sbr.rel (%p323) target = $region64
        $region63: #{tpu_custom_call.1} parent=55 // pred_region
          %326 = dma.done [#allocation6], 1024
        $region64: #{tpu_custom_call.1} parent=55 // pred_fallthru
          _
        %s327 = smul.u32 16, %s25
        %p328 = scmp.lt.s32.totalorder %s327, 31
        %s329 = scalar_select %p328, %s327, 31
        %s330 = smul.addr %s329, 4
        %s331 = scalar_lea.vmem %s0, %s330
        %p332 = pneg %p46
        %p333 = pneg %p43
        %p334 = pneg %p67
        %p335 = pneg %p64
        %p336 = pneg %p88
        %p337 = pneg %p85
        %p338 = pneg %p109
        %p339 = pneg %p106
        %p340 = pneg %p130
        %p341 = pneg %p127
        %p342 = pneg %p151
        %p343 = pneg %p148
        %p344 = pneg %p172
        %p345 = pneg %p169
        %p346 = pneg %p193
        %p347 = pneg %p190
        %p348 = pneg %p214
        %p349 = pneg %p211
        %p350 = pneg %p240
        %p351 = pneg %p237
        %s352 = sand.u32 %s227, 1
        %s353 = scalar_lea.sflag [#allocation4], %s352
        %s354 = sand.u32 %s227, 1
        %s355 = smul.addr %s354, 128
        %s356 = scalar_lea.vmem [#allocation7], %s355
        %s357 = smul.u32 16, %s25
        %p358 = scmp.lt.s32.totalorder %s357, 31
        %s359 = scalar_select %p358, %s357, 31
        %s360 = smul.addr %s359, 4
        %s361 = scalar_lea.vmem %s0, %s360
        %s362 = smul.u32 16, %s25
        %s363 = smul.u32 16, %s25
        %v365 = vld [vmem:[%s361] sm:$0xf]
        %v366 = vld [vmem:[%s361 + $0x4] sm:$0xf]
        %v367 = vld [vmem:[%s361 + $0x8] sm:$0xf]
        %v368 = vld [vmem:[%s361 + $0xc] sm:$0xf]
        %v369 = vld [vmem:[%s361 + $0x10] sm:$0xf]
        %v370 = vld [vmem:[%s361 + $0x14] sm:$0xf]
        %v371 = vld [vmem:[%s361 + $0x18] sm:$0xf]
        %v372 = vld [vmem:[%s361 + $0x1c] sm:$0xf]
        %v373 = vld [vmem:[%s361 + $0x20] sm:$0xf]
        %v374 = vld [vmem:[%s361 + $0x24] sm:$0xf]
        %v375 = vld [vmem:[%s361 + $0x28] sm:$0xf]
        %v376 = vld [vmem:[%s361 + $0x2c] sm:$0xf]
        %v377 = vld [vmem:[%s361 + $0x30] sm:$0xf]
        %v378 = vld [vmem:[%s361 + $0x34] sm:$0xf]
        %v379 = vld [vmem:[%s361 + $0x38] sm:$0xf]
        %v380 = vld [vmem:[%s361 + $0x3c] sm:$0xf]
        %v381 = vld [vmem:[%s1] sm:$0xff]
        %v382 = vld [vmem:[%s1 + $0x8] sm:$0xff]
        %v383 = vld [vmem:[%s1 + $0x10] sm:$0xff]
        %v384 = vld [vmem:[%s1 + $0x18] sm:$0xff]
        %v385 = vld [vmem:[%s1 + $0x20] sm:$0xff]
        %v386 = vld [vmem:[%s1 + $0x28] sm:$0xff]
        %v387 = vld [vmem:[%s1 + $0x30] sm:$0xff]
        %v388 = vld [vmem:[%s1 + $0x38] sm:$0xff]
        %v389 = vld [vmem:[%s2] sm:$0x3]
        %v391 = vlaneseq
        %v392 = vshrl.u32 %v391, 7
        %v393 = vsub.s32 0, %v392
        %v394 = vrot.slane %v389, %v393
        %v395 = vlaneseq
        %v396 = vshrl.u32 %v395, 7
        %v397 = vsub.s32 1, %v396
        %v398 = vrot.slane %v389, %v397
        %v417 = vunpack.c.l.b16 %v365
        %v418 = vunpack.c.l.b16 %v366
        %v419 = vunpack.c.l.b16 %v367
        %v420 = vunpack.c.l.b16 %v368
        %v421 = vunpack.c.l.b16 %v369
        %v422 = vunpack.c.l.b16 %v370
        %v423 = vunpack.c.l.b16 %v371
        %v424 = vunpack.c.l.b16 %v372
        %v425 = vunpack.c.l.b16 %v373
        %v426 = vunpack.c.l.b16 %v374
        %v427 = vunpack.c.l.b16 %v375
        %v428 = vunpack.c.l.b16 %v376
        %v429 = vunpack.c.l.b16 %v377
        %v430 = vunpack.c.l.b16 %v378
        %v431 = vunpack.c.l.b16 %v379
        %v432 = vunpack.c.l.b16 %v380
        %v433 = vpack.c.b16 %v418, %v417
        %v434 = vpack.c.b16 %v420, %v419
        %v435 = vpack.c.b16 %v422, %v421
        %v436 = vpack.c.b16 %v424, %v423
        %v437 = vpack.c.b16 %v426, %v425
        %v438 = vpack.c.b16 %v428, %v427
        %v439 = vpack.c.b16 %v430, %v429
        %v440 = vpack.c.b16 %v432, %v431
        %v449 = vunpack.c.l.b16 %v381
        %v450 = vunpack.c.h.b16 %v381
        %v451 = vunpack.c.l.b16 %v382
        %v452 = vunpack.c.h.b16 %v382
        %v453 = vunpack.c.l.b16 %v383
        %v454 = vunpack.c.h.b16 %v383
        %v455 = vunpack.c.l.b16 %v384
        %v456 = vunpack.c.h.b16 %v384
        %v457 = vunpack.c.l.b16 %v385
        %v458 = vunpack.c.h.b16 %v385
        %v459 = vunpack.c.l.b16 %v386
        %v460 = vunpack.c.h.b16 %v386
        %v461 = vunpack.c.l.b16 %v387
        %v462 = vunpack.c.h.b16 %v387
        %v463 = vunpack.c.l.b16 %v388
        %v464 = vunpack.c.h.b16 %v388
        %v465 = vpack.c.b16 %v451, %v449
        %v466 = vpack.c.b16 %v452, %v450
        %v467 = vpack.c.b16 %v455, %v453
        %v468 = vpack.c.b16 %v456, %v454
        %v469 = vpack.c.b16 %v459, %v457
        %v470 = vpack.c.b16 %v460, %v458
        %v471 = vpack.c.b16 %v463, %v461
        %v472 = vpack.c.b16 %v464, %v462
        %vm481 = vcmask 523264
        %v483 = vsel %vm481, %v433, 0
        %v486 = vsel %vm481, %v434, 0
        %v489 = vsel %vm481, %v435, 0
        %v492 = vsel %vm481, %v436, 0
        %v495 = vsel %vm481, %v437, 0
        %v498 = vsel %vm481, %v438, 0
        %v501 = vsel %vm481, %v439, 0
        %v504 = vsel %vm481, %v440, 0
        %506 = vmatprep.subr.bf16.mxu0 %v466
        %507 = vmatpush1.bf16.msra.mxu0 %v465
        %508 = vmatprep.subr.bf16.mxu0 %v468
        %509 = vmatpush1.bf16.msra.mxu0 %v467
        %510 = vmatprep.subr.bf16.mxu0 %v470
        %511 = vmatpush1.bf16.msra.mxu0 %v469
        %512 = vmatprep.subr.bf16.mxu0 %v472
        %513 = vmatpush1.bf16.msra.mxu0 %v471
        %514 = vmatprep.subr.bf16.mxu0 0
        %515 = vmatpush1.bf16.msra.mxu0 0
        %516 = vmatprep.subr.bf16.mxu0 0
        %517 = vmatpush1.bf16.msra.mxu0 0
        %518 = vmatprep.subr.bf16.mxu0 0
        %519 = vmatpush1.bf16.msra.mxu0 0
        %520 = vmatprep.subr.bf16.mxu0 0
        %521 = vmatpush1.bf16.msra.mxu0 0
        %522 = vmatprep.subr.bf16.mxu0 0
        %523 = vmatpush1.bf16.msra.mxu0 0
        %524 = vmatprep.subr.bf16.mxu0 0
        %525 = vmatpush1.bf16.msra.mxu0 0
        %526 = vmatprep.subr.bf16.mxu0 0
        %527 = vmatpush1.bf16.msra.mxu0 0
        %528 = vmatprep.subr.bf16.mxu0 0
        %529 = vmatpush1.bf16.msra.mxu0 0
        %530 = vmatprep.subr.bf16.mxu0 0
        %531 = vmatpush1.bf16.msra.mxu0 0
        %532 = vmatprep.subr.bf16.mxu0 0
        %533 = vmatpush1.bf16.msra.mxu0 0
        %534 = vmatprep.subr.bf16.mxu0 0
        %535 = vmatpush1.bf16.msra.mxu0 0
        %536 = vmatprep.subr.bf16.mxu0 0
        %537 = vmatpush1.bf16.msra.mxu0 0
        %538 = vmatprep.mubr.bf16.mxu0 0
        %539 = vmatmul.mubr.bf16.gmra.mrb[0].mxu0 %v483
        %v540 = vpop.f32.mrb[0].mxu0
        %v541 = vadd.f32 %v394, %v540
        %v542 = vpop.f32.mrb[0].mxu0
        %v543 = vadd.f32 %v398, %v542
        %v544 = vpop.f32.mrb[0].mxu0
        %v545 = vadd.f32 %v394, %v544
        %v546 = vpop.f32.mrb[0].mxu0
        %v547 = vadd.f32 %v398, %v546
        %548 = vmatprep.mubr.bf16.mxu0 0
        %549 = vmatmul.mubr.bf16.gmra.mrb[0].mxu0 %v486
        %v550 = vpop.f32.mrb[0].mxu0
        %v551 = vadd.f32 %v394, %v550
        %v552 = vpop.f32.mrb[0].mxu0
        %v553 = vadd.f32 %v398, %v552
        %v554 = vpop.f32.mrb[0].mxu0
        %v555 = vadd.f32 %v394, %v554
        %v556 = vpop.f32.mrb[0].mxu0
        %v557 = vadd.f32 %v398, %v556
        %558 = vmatprep.mubr.bf16.mxu0 0
        %559 = vmatmul.mubr.bf16.gmra.mrb[0].mxu0 %v489
        %v560 = vpop.f32.mrb[0].mxu0
        %v561 = vadd.f32 %v394, %v560
        %v562 = vpop.f32.mrb[0].mxu0
        %v563 = vadd.f32 %v398, %v562
        %v564 = vpop.f32.mrb[0].mxu0
        %v565 = vadd.f32 %v394, %v564
        %v566 = vpop.f32.mrb[0].mxu0
        %v567 = vadd.f32 %v398, %v566
        %568 = vmatprep.mubr.bf16.mxu0 0
        %569 = vmatmul.mubr.bf16.gmra.mrb[0].mxu0 %v492
        %v570 = vpop.f32.mrb[0].mxu0
        %v571 = vadd.f32 %v394, %v570
        %v572 = vpop.f32.mrb[0].mxu0
        %v573 = vadd.f32 %v398, %v572
        %v574 = vpop.f32.mrb[0].mxu0
        %v575 = vadd.f32 %v394, %v574
        %v576 = vpop.f32.mrb[0].mxu0
        %v577 = vadd.f32 %v398, %v576
        %578 = vmatprep.mubr.bf16.mxu0 0
        %579 = vmatmul.mubr.bf16.gmra.mrb[0].mxu0 %v495
        %v580 = vpop.f32.mrb[0].mxu0
        %v581 = vadd.f32 %v394, %v580
        %v582 = vpop.f32.mrb[0].mxu0
        %v583 = vadd.f32 %v398, %v582
        %v584 = vpop.f32.mrb[0].mxu0
        %v585 = vadd.f32 %v394, %v584
        %v586 = vpop.f32.mrb[0].mxu0
        %v587 = vadd.f32 %v398, %v586
        %588 = vmatprep.mubr.bf16.mxu0 0
        %589 = vmatmul.mubr.bf16.gmra.mrb[0].mxu0 %v498
        %v590 = vpop.f32.mrb[0].mxu0
        %v591 = vadd.f32 %v394, %v590
        %v592 = vpop.f32.mrb[0].mxu0
        %v593 = vadd.f32 %v398, %v592
        %v594 = vpop.f32.mrb[0].mxu0
        %v595 = vadd.f32 %v394, %v594
        %v596 = vpop.f32.mrb[0].mxu0
        %v597 = vadd.f32 %v398, %v596
        %598 = vmatprep.mubr.bf16.mxu0 0
        %599 = vmatmul.mubr.bf16.gmra.mrb[0].mxu0 %v501
        %v600 = vpop.f32.mrb[0].mxu0
        %v601 = vadd.f32 %v394, %v600
        %v602 = vpop.f32.mrb[0].mxu0
        %v603 = vadd.f32 %v398, %v602
        %v604 = vpop.f32.mrb[0].mxu0
        %v605 = vadd.f32 %v394, %v604
        %v606 = vpop.f32.mrb[0].mxu0
        %v607 = vadd.f32 %v398, %v606
        %608 = vmatprep.mubr.bf16.mxu0 0
        %609 = vmatmul.mubr.bf16.gmra.mrb[0].mxu0 %v504
        %v610 = vpop.f32.mrb[0].mxu0
        %v611 = vadd.f32 %v394, %v610
        %v612 = vpop.f32.mrb[0].mxu0
        %v613 = vadd.f32 %v398, %v612
        %v614 = vpop.f32.mrb[0].mxu0
        %v615 = vadd.f32 %v394, %v614
        %v616 = vpop.f32.mrb[0].mxu0
        %v617 = vadd.f32 %v398, %v616
        %618 = vdwg.mxu0
        %v619 = vmax.f32 %v541, 0.0
        %v620 = vmax.f32 %v543, 0.0
        %v621 = vmax.f32 %v545, 0.0
        %v622 = vmax.f32 %v547, 0.0
        %v623 = vmax.f32 %v551, 0.0
        %v624 = vmax.f32 %v553, 0.0
        %v625 = vmax.f32 %v555, 0.0
        %v626 = vmax.f32 %v557, 0.0
        %v627 = vmax.f32 %v561, 0.0
        %v628 = vmax.f32 %v563, 0.0
        %v629 = vmax.f32 %v565, 0.0
        %v630 = vmax.f32 %v567, 0.0
        %v631 = vmax.f32 %v571, 0.0
        %v632 = vmax.f32 %v573, 0.0
        %v633 = vmax.f32 %v575, 0.0
        %v634 = vmax.f32 %v577, 0.0
        %v635 = vmax.f32 %v581, 0.0
        %v636 = vmax.f32 %v583, 0.0
        %v637 = vmax.f32 %v585, 0.0
        %v638 = vmax.f32 %v587, 0.0
        %v639 = vmax.f32 %v591, 0.0
        %v640 = vmax.f32 %v593, 0.0
        %v641 = vmax.f32 %v595, 0.0
        %v642 = vmax.f32 %v597, 0.0
        %v643 = vmax.f32 %v601, 0.0
        %v644 = vmax.f32 %v603, 0.0
        %v645 = vmax.f32 %v605, 0.0
        %v646 = vmax.f32 %v607, 0.0
        %v647 = vmax.f32 %v611, 0.0
        %v648 = vmax.f32 %v613, 0.0
        %v649 = vmax.f32 %v615, 0.0
        %v650 = vmax.f32 %v617, 0.0
        %v651 = vpack.c.bf16 %v621, %v619
        %v652 = vpack.c.bf16 %v622, %v620
        %v653 = vpack.c.bf16 %v625, %v623
        %v654 = vpack.c.bf16 %v626, %v624
        %v655 = vpack.c.bf16 %v629, %v627
        %v656 = vpack.c.bf16 %v630, %v628
        %v657 = vpack.c.bf16 %v633, %v631
        %v658 = vpack.c.bf16 %v634, %v632
        %v659 = vpack.c.bf16 %v637, %v635
        %v660 = vpack.c.bf16 %v638, %v636
        %v661 = vpack.c.bf16 %v641, %v639
        %v662 = vpack.c.bf16 %v642, %v640
        %v663 = vpack.c.bf16 %v645, %v643
        %v664 = vpack.c.bf16 %v646, %v644
        %v665 = vpack.c.bf16 %v649, %v647
        %v666 = vpack.c.bf16 %v650, %v648
        %v667 = vld [vmem:[%s3] sm:$0xf]
        %v668 = vld [vmem:[%s3 + $0x4] sm:$0xf]
        %v669 = vld [vmem:[%s3 + $0x8] sm:$0xf]
        %v670 = vld [vmem:[%s3 + $0xc] sm:$0xf]
        %v671 = vld [vmem:[%s3 + $0x10] sm:$0xf]
        %v672 = vld [vmem:[%s3 + $0x14] sm:$0xf]
        %v673 = vld [vmem:[%s3 + $0x18] sm:$0xf]
        %v674 = vld [vmem:[%s3 + $0x1c] sm:$0xf]
        %v675 = vld [vmem:[%s3 + $0x20] sm:$0xf]
        %v676 = vld [vmem:[%s3 + $0x24] sm:$0xf]
        %v677 = vld [vmem:[%s3 + $0x28] sm:$0xf]
        %v678 = vld [vmem:[%s3 + $0x2c] sm:$0xf]
        %v679 = vld [vmem:[%s3 + $0x30] sm:$0xf]
        %v680 = vld [vmem:[%s3 + $0x34] sm:$0xf]
        %v681 = vld [vmem:[%s3 + $0x38] sm:$0xf]
        %v682 = vld [vmem:[%s3 + $0x3c] sm:$0xf]
        %v683 = vld [vmem:[%s3 + $0x40] sm:$0xf]
        %v684 = vld [vmem:[%s3 + $0x44] sm:$0xf]
        %v685 = vld [vmem:[%s3 + $0x48] sm:$0xf]
        %v686 = vld [vmem:[%s3 + $0x4c] sm:$0xf]
        %v687 = vld [vmem:[%s3 + $0x50] sm:$0xf]
        %v688 = vld [vmem:[%s3 + $0x54] sm:$0xf]
        %v689 = vld [vmem:[%s3 + $0x58] sm:$0xf]
        %v690 = vld [vmem:[%s3 + $0x5c] sm:$0xf]
        %v691 = vld [vmem:[%s3 + $0x60] sm:$0xf]
        %v692 = vld [vmem:[%s3 + $0x64] sm:$0xf]
        %v693 = vld [vmem:[%s3 + $0x68] sm:$0xf]
        %v694 = vld [vmem:[%s3 + $0x6c] sm:$0xf]
        %v695 = vld [vmem:[%s3 + $0x70] sm:$0xf]
        %v696 = vld [vmem:[%s3 + $0x74] sm:$0xf]
        %v697 = vld [vmem:[%s3 + $0x78] sm:$0xf]
        %v698 = vld [vmem:[%s3 + $0x7c] sm:$0xf]
        %v699 = vld [vmem:[%s4] sm:$0x1]
        %v701 = vlaneseq
        %v702 = vshrl.u32 %v701, 7
        %v703 = vsub.s32 0, %v702
        %v704 = vrot.slane %v699, %v703
        %v738 = vunpack.c.l.b16 %v667
        %v739 = vunpack.c.l.b16 %v668
        %v740 = vunpack.c.l.b16 %v669
        %v741 = vunpack.c.l.b16 %v670
        %v742 = vunpack.c.l.b16 %v671
        %v743 = vunpack.c.l.b16 %v672
        %v744 = vunpack.c.l.b16 %v673
        %v745 = vunpack.c.l.b16 %v674
        %v746 = vunpack.c.l.b16 %v675
        %v747 = vunpack.c.l.b16 %v676
        %v748 = vunpack.c.l.b16 %v677
        %v749 = vunpack.c.l.b16 %v678
        %v750 = vunpack.c.l.b16 %v679
        %v751 = vunpack.c.l.b16 %v680
        %v752 = vunpack.c.l.b16 %v681
        %v753 = vunpack.c.l.b16 %v682
        %v754 = vunpack.c.l.b16 %v683
        %v755 = vunpack.c.l.b16 %v684
        %v756 = vunpack.c.l.b16 %v685
        %v757 = vunpack.c.l.b16 %v686
        %v758 = vunpack.c.l.b16 %v687
        %v759 = vunpack.c.l.b16 %v688
        %v760 = vunpack.c.l.b16 %v689
        %v761 = vunpack.c.l.b16 %v690
        %v762 = vunpack.c.l.b16 %v691
        %v763 = vunpack.c.l.b16 %v692
        %v764 = vunpack.c.l.b16 %v693
        %v765 = vunpack.c.l.b16 %v694
        %v766 = vunpack.c.l.b16 %v695
        %v767 = vunpack.c.l.b16 %v696
        %v768 = vunpack.c.l.b16 %v697
        %v769 = vunpack.c.l.b16 %v698
        %v770 = vpack.c.b16 %v739, %v738
        %v771 = vpack.c.b16 %v741, %v740
        %v772 = vpack.c.b16 %v743, %v742
        %v773 = vpack.c.b16 %v745, %v744
        %v774 = vpack.c.b16 %v747, %v746
        %v775 = vpack.c.b16 %v749, %v748
        %v776 = vpack.c.b16 %v751, %v750
        %v777 = vpack.c.b16 %v753, %v752
        %v778 = vpack.c.b16 %v755, %v754
        %v779 = vpack.c.b16 %v757, %v756
        %v780 = vpack.c.b16 %v759, %v758
        %v781 = vpack.c.b16 %v761, %v760
        %v782 = vpack.c.b16 %v763, %v762
        %v783 = vpack.c.b16 %v765, %v764
        %v784 = vpack.c.b16 %v767, %v766
        %v785 = vpack.c.b16 %v769, %v768
        %802 = vmatprep.subr.bf16.mxu0 0
        %803 = vmatpush1.bf16.msra.mxu0 %v770
        %804 = vmatprep.subr.bf16.mxu0 0
        %805 = vmatpush1.bf16.msra.mxu0 %v771
        %806 = vmatprep.subr.bf16.mxu0 0
        %807 = vmatpush1.bf16.msra.mxu0 %v772
        %808 = vmatprep.subr.bf16.mxu0 0
        %809 = vmatpush1.bf16.msra.mxu0 %v773
        %810 = vmatprep.subr.bf16.mxu0 0
        %811 = vmatpush1.bf16.msra.mxu0 %v774
        %812 = vmatprep.subr.bf16.mxu0 0
        %813 = vmatpush1.bf16.msra.mxu0 %v775
        %814 = vmatprep.subr.bf16.mxu0 0
        %815 = vmatpush1.bf16.msra.mxu0 %v776
        %816 = vmatprep.subr.bf16.mxu0 0
        %817 = vmatpush1.bf16.msra.mxu0 %v777
        %818 = vmatprep.subr.bf16.mxu0 0
        %819 = vmatpush1.bf16.msra.mxu0 %v778
        %820 = vmatprep.subr.bf16.mxu0 0
        %821 = vmatpush1.bf16.msra.mxu0 %v779
        %822 = vmatprep.subr.bf16.mxu0 0
        %823 = vmatpush1.bf16.msra.mxu0 %v780
        %824 = vmatprep.subr.bf16.mxu0 0
        %825 = vmatpush1.bf16.msra.mxu0 %v781
        %826 = vmatprep.subr.bf16.mxu0 0
        %827 = vmatpush1.bf16.msra.mxu0 %v782
        %828 = vmatprep.subr.bf16.mxu0 0
        %829 = vmatpush1.bf16.msra.mxu0 %v783
        %830 = vmatprep.subr.bf16.mxu0 0
        %831 = vmatpush1.bf16.msra.mxu0 %v784
        %832 = vmatprep.subr.bf16.mxu0 0
        %833 = vmatpush1.bf16.msra.mxu0 %v785
        %834 = vmatprep.mubr.bf16.mxu0 %v652
        %835 = vmatmul.mubr.bf16.gmra.mrb[0].mxu0 %v651
        %v836 = vpop.f32.mrb[0].mxu0
        %v837 = vadd.f32 %v704, %v836
        %v838 = vpop.f32.mrb[0].mxu0
        %v839 = vpop.f32.mrb[0].mxu0
        %v840 = vadd.f32 %v704, %v839
        %v841 = vpop.f32.mrb[0].mxu0
        %842 = vmatprep.mubr.bf16.mxu0 %v654
        %843 = vmatmul.mubr.bf16.gmra.mrb[0].mxu0 %v653
        %v844 = vpop.f32.mrb[0].mxu0
        %v845 = vadd.f32 %v704, %v844
        %v846 = vpop.f32.mrb[0].mxu0
        %v847 = vpop.f32.mrb[0].mxu0
        %v848 = vadd.f32 %v704, %v847
        %v849 = vpop.f32.mrb[0].mxu0
        %850 = vmatprep.mubr.bf16.mxu0 %v656
        %851 = vmatmul.mubr.bf16.gmra.mrb[0].mxu0 %v655
        %v852 = vpop.f32.mrb[0].mxu0
        %v853 = vadd.f32 %v704, %v852
        %v854 = vpop.f32.mrb[0].mxu0
        %v855 = vpop.f32.mrb[0].mxu0
        %v856 = vadd.f32 %v704, %v855
        %v857 = vpop.f32.mrb[0].mxu0
        %858 = vmatprep.mubr.bf16.mxu0 %v658
        %859 = vmatmul.mubr.bf16.gmra.mrb[0].mxu0 %v657
        %v860 = vpop.f32.mrb[0].mxu0
        %v861 = vadd.f32 %v704, %v860
        %v862 = vpop.f32.mrb[0].mxu0
        %v863 = vpop.f32.mrb[0].mxu0
        %v864 = vadd.f32 %v704, %v863
        %v865 = vpop.f32.mrb[0].mxu0
        %866 = vmatprep.mubr.bf16.mxu0 %v660
        %867 = vmatmul.mubr.bf16.gmra.mrb[0].mxu0 %v659
        %v868 = vpop.f32.mrb[0].mxu0
        %v869 = vadd.f32 %v704, %v868
        %v870 = vpop.f32.mrb[0].mxu0
        %v871 = vpop.f32.mrb[0].mxu0
        %v872 = vadd.f32 %v704, %v871
        %v873 = vpop.f32.mrb[0].mxu0
        %874 = vmatprep.mubr.bf16.mxu0 %v662
        %875 = vmatmul.mubr.bf16.gmra.mrb[0].mxu0 %v661
        %v876 = vpop.f32.mrb[0].mxu0
        %v877 = vadd.f32 %v704, %v876
        %v878 = vpop.f32.mrb[0].mxu0
        %v879 = vpop.f32.mrb[0].mxu0
        %v880 = vadd.f32 %v704, %v879
        %v881 = vpop.f32.mrb[0].mxu0
        %882 = vmatprep.mubr.bf16.mxu0 %v664
        %883 = vmatmul.mubr.bf16.gmra.mrb[0].mxu0 %v663
        %v884 = vpop.f32.mrb[0].mxu0
        %v885 = vadd.f32 %v704, %v884
        %v886 = vpop.f32.mrb[0].mxu0
        %v887 = vpop.f32.mrb[0].mxu0
        %v888 = vadd.f32 %v704, %v887
        %v889 = vpop.f32.mrb[0].mxu0
        %890 = vmatprep.mubr.bf16.mxu0 %v666
        %891 = vmatmul.mubr.bf16.gmra.mrb[0].mxu0 %v665
        %v892 = vpop.f32.mrb[0].mxu0
        %v893 = vadd.f32 %v704, %v892
        %v894 = vpop.f32.mrb[0].mxu0
        %v895 = vpop.f32.mrb[0].mxu0
        %v896 = vadd.f32 %v704, %v895
        %v897 = vpop.f32.mrb[0].mxu0
        %898 = vdwg.mxu0
        %v899 = vmax.f32 %v837, 0.0
        %v900 = vmax.f32 %v840, 0.0
        %v901 = vmax.f32 %v845, 0.0
        %v902 = vmax.f32 %v848, 0.0
        %v903 = vmax.f32 %v853, 0.0
        %v904 = vmax.f32 %v856, 0.0
        %v905 = vmax.f32 %v861, 0.0
        %v906 = vmax.f32 %v864, 0.0
        %v907 = vmax.f32 %v869, 0.0
        %v908 = vmax.f32 %v872, 0.0
        %v909 = vmax.f32 %v877, 0.0
        %v910 = vmax.f32 %v880, 0.0
        %v911 = vmax.f32 %v885, 0.0
        %v912 = vmax.f32 %v888, 0.0
        %v913 = vmax.f32 %v893, 0.0
        %v914 = vmax.f32 %v896, 0.0
        %v915 = vpack.c.bf16 %v900, %v899
        %v916 = vpack.c.bf16 %v902, %v901
        %v917 = vpack.c.bf16 %v904, %v903
        %v918 = vpack.c.bf16 %v906, %v905
        %v919 = vpack.c.bf16 %v908, %v907
        %v920 = vpack.c.bf16 %v910, %v909
        %v921 = vpack.c.bf16 %v912, %v911
        %v922 = vpack.c.bf16 %v914, %v913
        %v923 = vld [vmem:[#allocation2] sm:$0xf]
        %v924 = vld [vmem:[#allocation2 + $0x4] sm:$0xf]
        %v925 = vld [vmem:[#allocation2 + $0x8] sm:$0xf]
        %v926 = vld [vmem:[#allocation2 + $0xc] sm:$0xf]
        %v927 = vld [vmem:[#allocation2 + $0x10] sm:$0xf]
        %v928 = vld [vmem:[#allocation2 + $0x14] sm:$0xf]
        %v929 = vld [vmem:[#allocation2 + $0x18] sm:$0xf]
        %v930 = vld [vmem:[#allocation2 + $0x1c] sm:$0xf]
        %v931 = vld [vmem:[#allocation2 + $0x20] sm:$0xf]
        %v932 = vld [vmem:[#allocation2 + $0x24] sm:$0xf]
        %v933 = vld [vmem:[#allocation2 + $0x28] sm:$0xf]
        %v934 = vld [vmem:[#allocation2 + $0x2c] sm:$0xf]
        %v935 = vld [vmem:[#allocation2 + $0x30] sm:$0xf]
        %v936 = vld [vmem:[#allocation2 + $0x34] sm:$0xf]
        %v937 = vld [vmem:[#allocation2 + $0x38] sm:$0xf]
        %v938 = vld [vmem:[#allocation2 + $0x3c] sm:$0xf]
        %v939 = vld [vmem:[%s6] sm:$0x1]
        %v941 = vlaneseq
        %v942 = vshrl.u32 %v941, 7
        %v943 = vsub.s32 0, %v942
        %v944 = vrot.slane %v939, %v943
        %v962 = vunpack.c.l.b16 %v923
        %v963 = vunpack.c.l.b16 %v924
        %v964 = vunpack.c.l.b16 %v925
        %v965 = vunpack.c.l.b16 %v926
        %v966 = vunpack.c.l.b16 %v927
        %v967 = vunpack.c.l.b16 %v928
        %v968 = vunpack.c.l.b16 %v929
        %v969 = vunpack.c.l.b16 %v930
        %v970 = vunpack.c.l.b16 %v931
        %v971 = vunpack.c.l.b16 %v932
        %v972 = vunpack.c.l.b16 %v933
        %v973 = vunpack.c.l.b16 %v934
        %v974 = vunpack.c.l.b16 %v935
        %v975 = vunpack.c.l.b16 %v936
        %v976 = vunpack.c.l.b16 %v937
        %v977 = vunpack.c.l.b16 %v938
        %v978 = vpack.c.b16 %v963, %v962
        %v979 = vpack.c.b16 %v965, %v964
        %v980 = vpack.c.b16 %v967, %v966
        %v981 = vpack.c.b16 %v969, %v968
        %v982 = vpack.c.b16 %v971, %v970
        %v983 = vpack.c.b16 %v973, %v972
        %v984 = vpack.c.b16 %v975, %v974
        %v985 = vpack.c.b16 %v977, %v976
        %994 = vmatprep.subr.bf16.mxu0 0
        %995 = vmatpush1.bf16.msra.mxu0 %v978
        %996 = vmatprep.subr.bf16.mxu0 0
        %997 = vmatpush1.bf16.msra.mxu0 %v979
        %998 = vmatprep.subr.bf16.mxu0 0
        %999 = vmatpush1.bf16.msra.mxu0 %v980
        %1000 = vmatprep.subr.bf16.mxu0 0
        %1001 = vmatpush1.bf16.msra.mxu0 %v981
        %1002 = vmatprep.subr.bf16.mxu0 0
        %1003 = vmatpush1.bf16.msra.mxu0 %v982
        %1004 = vmatprep.subr.bf16.mxu0 0
        %1005 = vmatpush1.bf16.msra.mxu0 %v983
        %1006 = vmatprep.subr.bf16.mxu0 0
        %1007 = vmatpush1.bf16.msra.mxu0 %v984
        %1008 = vmatprep.subr.bf16.mxu0 0
        %1009 = vmatpush1.bf16.msra.mxu0 %v985
        %1010 = vmatprep.subr.bf16.mxu0 0
        %1011 = vmatpush1.bf16.msra.mxu0 0
        %1012 = vmatprep.subr.bf16.mxu0 0
        %1013 = vmatpush1.bf16.msra.mxu0 0
        %1014 = vmatprep.subr.bf16.mxu0 0
        %1015 = vmatpush1.bf16.msra.mxu0 0
        %1016 = vmatprep.subr.bf16.mxu0 0
        %1017 = vmatpush1.bf16.msra.mxu0 0
        %1018 = vmatprep.subr.bf16.mxu0 0
        %1019 = vmatpush1.bf16.msra.mxu0 0
        %1020 = vmatprep.subr.bf16.mxu0 0
        %1021 = vmatpush1.bf16.msra.mxu0 0
        %1022 = vmatprep.subr.bf16.mxu0 0
        %1023 = vmatpush1.bf16.msra.mxu0 0
        %1024 = vmatprep.subr.bf16.mxu0 0
        %1025 = vmatpush1.bf16.msra.mxu0 0
        %1026 = vmatprep.mubr.bf16.mxu0 0
        %1027 = vmatmul.mubr.bf16.gmra.mrb[0].mxu0 %v915
        %v1028 = vpop.f32.mrb[0].mxu0
        %v1029 = vadd.f32 %v944, %v1028
        %v1030 = vpop.f32.mrb[0].mxu0
        %v1031 = vpop.f32.mrb[0].mxu0
        %v1032 = vadd.f32 %v944, %v1031
        %v1033 = vpop.f32.mrb[0].mxu0
        %1034 = vmatprep.mubr.bf16.mxu0 0
        %1035 = vmatmul.mubr.bf16.gmra.mrb[0].mxu0 %v916
        %v1036 = vpop.f32.mrb[0].mxu0
        %v1037 = vadd.f32 %v944, %v1036
        %v1038 = vpop.f32.mrb[0].mxu0
        %v1039 = vpop.f32.mrb[0].mxu0
        %v1040 = vadd.f32 %v944, %v1039
        %v1041 = vpop.f32.mrb[0].mxu0
        %1042 = vmatprep.mubr.bf16.mxu0 0
        %1043 = vmatmul.mubr.bf16.gmra.mrb[0].mxu0 %v917
        %v1044 = vpop.f32.mrb[0].mxu0
        %v1045 = vadd.f32 %v944, %v1044
        %v1046 = vpop.f32.mrb[0].mxu0
        %v1047 = vpop.f32.mrb[0].mxu0
        %v1048 = vadd.f32 %v944, %v1047
        %v1049 = vpop.f32.mrb[0].mxu0
        %1050 = vmatprep.mubr.bf16.mxu0 0
        %1051 = vmatmul.mubr.bf16.gmra.mrb[0].mxu0 %v918
        %v1052 = vpop.f32.mrb[0].mxu0
        %v1053 = vadd.f32 %v944, %v1052
        %v1054 = vpop.f32.mrb[0].mxu0
        %v1055 = vpop.f32.mrb[0].mxu0
        %v1056 = vadd.f32 %v944, %v1055
        %v1057 = vpop.f32.mrb[0].mxu0
        %1058 = vmatprep.mubr.bf16.mxu0 0
        %1059 = vmatmul.mubr.bf16.gmra.mrb[0].mxu0 %v919
        %v1060 = vpop.f32.mrb[0].mxu0
        %v1061 = vadd.f32 %v944, %v1060
        %v1062 = vpop.f32.mrb[0].mxu0
        %v1063 = vpop.f32.mrb[0].mxu0
        %v1064 = vadd.f32 %v944, %v1063
        %v1065 = vpop.f32.mrb[0].mxu0
        %1066 = vmatprep.mubr.bf16.mxu0 0
        %1067 = vmatmul.mubr.bf16.gmra.mrb[0].mxu0 %v920
        %v1068 = vpop.f32.mrb[0].mxu0
        %v1069 = vadd.f32 %v944, %v1068
        %v1070 = vpop.f32.mrb[0].mxu0
        %v1071 = vpop.f32.mrb[0].mxu0
        %v1072 = vadd.f32 %v944, %v1071
        %v1073 = vpop.f32.mrb[0].mxu0
        %1074 = vmatprep.mubr.bf16.mxu0 0
        %1075 = vmatmul.mubr.bf16.gmra.mrb[0].mxu0 %v921
        %v1076 = vpop.f32.mrb[0].mxu0
        %v1077 = vadd.f32 %v944, %v1076
        %v1078 = vpop.f32.mrb[0].mxu0
        %v1079 = vpop.f32.mrb[0].mxu0
        %v1080 = vadd.f32 %v944, %v1079
        %v1081 = vpop.f32.mrb[0].mxu0
        %1082 = vmatprep.mubr.bf16.mxu0 0
        %1083 = vmatmul.mubr.bf16.gmra.mrb[0].mxu0 %v922
        %v1084 = vpop.f32.mrb[0].mxu0
        %v1085 = vadd.f32 %v944, %v1084
        %v1086 = vpop.f32.mrb[0].mxu0
        %v1087 = vpop.f32.mrb[0].mxu0
        %v1088 = vadd.f32 %v944, %v1087
        %v1089 = vpop.f32.mrb[0].mxu0
        %1090 = vdwg.mxu0
        %v1091 = vmax.f32 %v1029, 0.0
        %v1092 = vmax.f32 %v1032, 0.0
        %v1093 = vmax.f32 %v1037, 0.0
        %v1094 = vmax.f32 %v1040, 0.0
        %v1095 = vmax.f32 %v1045, 0.0
        %v1096 = vmax.f32 %v1048, 0.0
        %v1097 = vmax.f32 %v1053, 0.0
        %v1098 = vmax.f32 %v1056, 0.0
        %v1099 = vmax.f32 %v1061, 0.0
        %v1100 = vmax.f32 %v1064, 0.0
        %v1101 = vmax.f32 %v1069, 0.0
        %v1102 = vmax.f32 %v1072, 0.0
        %v1103 = vmax.f32 %v1077, 0.0
        %v1104 = vmax.f32 %v1080, 0.0
        %v1105 = vmax.f32 %v1085, 0.0
        %v1106 = vmax.f32 %v1088, 0.0
        %v1107 = vpack.c.bf16 %v1092, %v1091
        %v1108 = vpack.c.bf16 %v1094, %v1093
        %v1109 = vpack.c.bf16 %v1096, %v1095
        %v1110 = vpack.c.bf16 %v1098, %v1097
        %v1111 = vpack.c.bf16 %v1100, %v1099
        %v1112 = vpack.c.bf16 %v1102, %v1101
        %v1113 = vpack.c.bf16 %v1104, %v1103
        %v1114 = vpack.c.bf16 %v1106, %v1105
        %v1115 = vld [vmem:[#allocation5] sm:$0xf]
        %v1116 = vld [vmem:[#allocation5 + $0x4] sm:$0xf]
        %v1117 = vld [vmem:[#allocation5 + $0x8] sm:$0xf]
        %v1118 = vld [vmem:[#allocation5 + $0xc] sm:$0xf]
        %v1119 = vld [vmem:[#allocation5 + $0x10] sm:$0xf]
        %v1120 = vld [vmem:[#allocation5 + $0x14] sm:$0xf]
        %v1121 = vld [vmem:[#allocation5 + $0x18] sm:$0xf]
        %v1122 = vld [vmem:[#allocation5 + $0x1c] sm:$0xf]
        %v1123 = vld [vmem:[#allocation5 + $0x20] sm:$0xf]
        %v1124 = vld [vmem:[#allocation5 + $0x24] sm:$0xf]
        %v1125 = vld [vmem:[#allocation5 + $0x28] sm:$0xf]
        %v1126 = vld [vmem:[#allocation5 + $0x2c] sm:$0xf]
        %v1127 = vld [vmem:[#allocation5 + $0x30] sm:$0xf]
        %v1128 = vld [vmem:[#allocation5 + $0x34] sm:$0xf]
        %v1129 = vld [vmem:[#allocation5 + $0x38] sm:$0xf]
        %v1130 = vld [vmem:[#allocation5 + $0x3c] sm:$0xf]
        %v1131 = vld [vmem:[%s8] sm:$0x1]
        %v1133 = vlaneseq
        %v1134 = vshrl.u32 %v1133, 7
        %v1135 = vsub.s32 0, %v1134
        %v1136 = vrot.slane %v1131, %v1135
        %v1154 = vunpack.c.l.b16 %v1115
        %v1155 = vunpack.c.l.b16 %v1116
        %v1156 = vunpack.c.l.b16 %v1117
        %v1157 = vunpack.c.l.b16 %v1118
        %v1158 = vunpack.c.l.b16 %v1119
        %v1159 = vunpack.c.l.b16 %v1120
        %v1160 = vunpack.c.l.b16 %v1121
        %v1161 = vunpack.c.l.b16 %v1122
        %v1162 = vunpack.c.l.b16 %v1123
        %v1163 = vunpack.c.l.b16 %v1124
        %v1164 = vunpack.c.l.b16 %v1125
        %v1165 = vunpack.c.l.b16 %v1126
        %v1166 = vunpack.c.l.b16 %v1127
        %v1167 = vunpack.c.l.b16 %v1128
        %v1168 = vunpack.c.l.b16 %v1129
        %v1169 = vunpack.c.l.b16 %v1130
        %v1170 = vpack.c.b16 %v1155, %v1154
        %v1171 = vpack.c.b16 %v1157, %v1156
        %v1172 = vpack.c.b16 %v1159, %v1158
        %v1173 = vpack.c.b16 %v1161, %v1160
        %v1174 = vpack.c.b16 %v1163, %v1162
        %v1175 = vpack.c.b16 %v1165, %v1164
        %v1176 = vpack.c.b16 %v1167, %v1166
        %v1177 = vpack.c.b16 %v1169, %v1168
        %1186 = vmatprep.subr.bf16.mxu0 0
        %1187 = vmatpush1.bf16.msra.mxu0 %v1170
        %1188 = vmatprep.subr.bf16.mxu0 0
        %1189 = vmatpush1.bf16.msra.mxu0 %v1171
        %1190 = vmatprep.subr.bf16.mxu0 0
        %1191 = vmatpush1.bf16.msra.mxu0 %v1172
        %1192 = vmatprep.subr.bf16.mxu0 0
        %1193 = vmatpush1.bf16.msra.mxu0 %v1173
        %1194 = vmatprep.subr.bf16.mxu0 0
        %1195 = vmatpush1.bf16.msra.mxu0 %v1174
        %1196 = vmatprep.subr.bf16.mxu0 0
        %1197 = vmatpush1.bf16.msra.mxu0 %v1175
        %1198 = vmatprep.subr.bf16.mxu0 0
        %1199 = vmatpush1.bf16.msra.mxu0 %v1176
        %1200 = vmatprep.subr.bf16.mxu0 0
        %1201 = vmatpush1.bf16.msra.mxu0 %v1177
        %1202 = vmatprep.subr.bf16.mxu0 0
        %1203 = vmatpush1.bf16.msra.mxu0 0
        %1204 = vmatprep.subr.bf16.mxu0 0
        %1205 = vmatpush1.bf16.msra.mxu0 0
        %1206 = vmatprep.subr.bf16.mxu0 0
        %1207 = vmatpush1.bf16.msra.mxu0 0
        %1208 = vmatprep.subr.bf16.mxu0 0
        %1209 = vmatpush1.bf16.msra.mxu0 0
        %1210 = vmatprep.subr.bf16.mxu0 0
        %1211 = vmatpush1.bf16.msra.mxu0 0
        %1212 = vmatprep.subr.bf16.mxu0 0
        %1213 = vmatpush1.bf16.msra.mxu0 0
        %1214 = vmatprep.subr.bf16.mxu0 0
        %1215 = vmatpush1.bf16.msra.mxu0 0
        %1216 = vmatprep.subr.bf16.mxu0 0
        %1217 = vmatpush1.bf16.msra.mxu0 0
        %1218 = vmatprep.mubr.bf16.mxu0 0
        %1219 = vmatmul.mubr.bf16.gmra.mrb[0].mxu0 %v1107
        %v1220 = vpop.f32.mrb[0].mxu0
        %v1221 = vadd.f32 %v1136, %v1220
        %v1222 = vpop.f32.mrb[0].mxu0
        %v1223 = vpop.f32.mrb[0].mxu0
        %v1224 = vadd.f32 %v1136, %v1223
        %v1225 = vpop.f32.mrb[0].mxu0
        %1226 = vmatprep.mubr.bf16.mxu0 0
        %1227 = vmatmul.mubr.bf16.gmra.mrb[0].mxu0 %v1108
        %v1228 = vpop.f32.mrb[0].mxu0
        %v1229 = vadd.f32 %v1136, %v1228
        %v1230 = vpop.f32.mrb[0].mxu0
        %v1231 = vpop.f32.mrb[0].mxu0
        %v1232 = vadd.f32 %v1136, %v1231
        %v1233 = vpop.f32.mrb[0].mxu0
        %1234 = vmatprep.mubr.bf16.mxu0 0
        %1235 = vmatmul.mubr.bf16.gmra.mrb[0].mxu0 %v1109
        %v1236 = vpop.f32.mrb[0].mxu0
        %v1237 = vadd.f32 %v1136, %v1236
        %v1238 = vpop.f32.mrb[0].mxu0
        %v1239 = vpop.f32.mrb[0].mxu0
        %v1240 = vadd.f32 %v1136, %v1239
        %v1241 = vpop.f32.mrb[0].mxu0
        %1242 = vmatprep.mubr.bf16.mxu0 0
        %1243 = vmatmul.mubr.bf16.gmra.mrb[0].mxu0 %v1110
        %v1244 = vpop.f32.mrb[0].mxu0
        %v1245 = vadd.f32 %v1136, %v1244
        %v1246 = vpop.f32.mrb[0].mxu0
        %v1247 = vpop.f32.mrb[0].mxu0
        %v1248 = vadd.f32 %v1136, %v1247
        %v1249 = vpop.f32.mrb[0].mxu0
        %1250 = vmatprep.mubr.bf16.mxu0 0
        %1251 = vmatmul.mubr.bf16.gmra.mrb[0].mxu0 %v1111
        %v1252 = vpop.f32.mrb[0].mxu0
        %v1253 = vadd.f32 %v1136, %v1252
        %v1254 = vpop.f32.mrb[0].mxu0
        %v1255 = vpop.f32.mrb[0].mxu0
        %v1256 = vadd.f32 %v1136, %v1255
        %v1257 = vpop.f32.mrb[0].mxu0
        %1258 = vmatprep.mubr.bf16.mxu0 0
        %1259 = vmatmul.mubr.bf16.gmra.mrb[0].mxu0 %v1112
        %v1260 = vpop.f32.mrb[0].mxu0
        %v1261 = vadd.f32 %v1136, %v1260
        %v1262 = vpop.f32.mrb[0].mxu0
        %v1263 = vpop.f32.mrb[0].mxu0
        %v1264 = vadd.f32 %v1136, %v1263
        %v1265 = vpop.f32.mrb[0].mxu0
        %1266 = vmatprep.mubr.bf16.mxu0 0
        %1267 = vmatmul.mubr.bf16.gmra.mrb[0].mxu0 %v1113
        %v1268 = vpop.f32.mrb[0].mxu0
        %v1269 = vadd.f32 %v1136, %v1268
        %v1270 = vpop.f32.mrb[0].mxu0
        %v1271 = vpop.f32.mrb[0].mxu0
        %v1272 = vadd.f32 %v1136, %v1271
        %v1273 = vpop.f32.mrb[0].mxu0
        %1274 = vmatprep.mubr.bf16.mxu0 0
        %1275 = vmatmul.mubr.bf16.gmra.mrb[0].mxu0 %v1114
        %v1276 = vpop.f32.mrb[0].mxu0
        %v1277 = vadd.f32 %v1136, %v1276
        %v1278 = vpop.f32.mrb[0].mxu0
        %v1279 = vpop.f32.mrb[0].mxu0
        %v1280 = vadd.f32 %v1136, %v1279
        %v1281 = vpop.f32.mrb[0].mxu0
        %1282 = vdwg.mxu0
        %v1283 = vxor.u32 %v1221, 2147483648
        %v1284 = vxor.u32 %v1224, 2147483648
        %v1285 = vxor.u32 %v1229, 2147483648
        %v1286 = vxor.u32 %v1232, 2147483648
        %v1287 = vxor.u32 %v1237, 2147483648
        %v1288 = vxor.u32 %v1240, 2147483648
        %v1289 = vxor.u32 %v1245, 2147483648
        %v1290 = vxor.u32 %v1248, 2147483648
        %v1291 = vxor.u32 %v1253, 2147483648
        %v1292 = vxor.u32 %v1256, 2147483648
        %v1293 = vxor.u32 %v1261, 2147483648
        %v1294 = vxor.u32 %v1264, 2147483648
        %v1295 = vxor.u32 %v1269, 2147483648
        %v1296 = vxor.u32 %v1272, 2147483648
        %v1297 = vxor.u32 %v1277, 2147483648
        %v1298 = vxor.u32 %v1280, 2147483648
        %v1299 = vmul.f32 %v1283, 1.442695
        %v1300 = vpow.pop %v1299
        %v1301 = vmul.f32 %v1284, 1.442695
        %v1302 = vpow.pop %v1301
        %v1303 = vmul.f32 %v1285, 1.442695
        %v1304 = vpow.pop %v1303
        %v1305 = vmul.f32 %v1286, 1.442695
        %v1306 = vpow.pop %v1305
        %v1307 = vmul.f32 %v1287, 1.442695
        %v1308 = vpow.pop %v1307
        %v1309 = vmul.f32 %v1288, 1.442695
        %v1310 = vpow.pop %v1309
        %v1311 = vmul.f32 %v1289, 1.442695
        %v1312 = vpow.pop %v1311
        %v1313 = vmul.f32 %v1290, 1.442695
        %v1314 = vpow.pop %v1313
        %v1315 = vmul.f32 %v1291, 1.442695
        %v1316 = vpow.pop %v1315
        %v1317 = vmul.f32 %v1292, 1.442695
        %v1318 = vpow.pop %v1317
        %v1319 = vmul.f32 %v1293, 1.442695
        %v1320 = vpow.pop %v1319
        %v1321 = vmul.f32 %v1294, 1.442695
        %v1322 = vpow.pop %v1321
        %v1323 = vmul.f32 %v1295, 1.442695
        %v1324 = vpow.pop %v1323
        %v1325 = vmul.f32 %v1296, 1.442695
        %v1326 = vpow.pop %v1325
        %v1327 = vmul.f32 %v1297, 1.442695
        %v1328 = vpow.pop %v1327
        %v1329 = vmul.f32 %v1298, 1.442695
        %v1330 = vpow.pop %v1329
        %v1331 = vadd.f32 %v1300, 1.0
        %v1332 = vadd.f32 %v1302, 1.0
        %v1333 = vadd.f32 %v1304, 1.0
        %v1334 = vadd.f32 %v1306, 1.0
        %v1335 = vadd.f32 %v1308, 1.0
        %v1336 = vadd.f32 %v1310, 1.0
        %v1337 = vadd.f32 %v1312, 1.0
        %v1338 = vadd.f32 %v1314, 1.0
        %v1339 = vadd.f32 %v1316, 1.0
        %v1340 = vadd.f32 %v1318, 1.0
        %v1341 = vadd.f32 %v1320, 1.0
        %v1342 = vadd.f32 %v1322, 1.0
        %v1343 = vadd.f32 %v1324, 1.0
        %v1344 = vadd.f32 %v1326, 1.0
        %v1345 = vadd.f32 %v1328, 1.0
        %v1346 = vadd.f32 %v1330, 1.0
        %v1347 = vrcp.pop %v1331
        %v1348 = vmul.f32 1.0, %v1347
        %v1349 = vrcp.pop %v1332
        %v1350 = vmul.f32 1.0, %v1349
        %v1351 = vrcp.pop %v1333
        %v1352 = vmul.f32 1.0, %v1351
        %v1353 = vrcp.pop %v1334
        %v1354 = vmul.f32 1.0, %v1353
        %v1355 = vrcp.pop %v1335
        %v1356 = vmul.f32 1.0, %v1355
        %v1357 = vrcp.pop %v1336
        %v1358 = vmul.f32 1.0, %v1357
        %v1359 = vrcp.pop %v1337
        %v1360 = vmul.f32 1.0, %v1359
        %v1361 = vrcp.pop %v1338
        %v1362 = vmul.f32 1.0, %v1361
        %v1363 = vrcp.pop %v1339
        %v1364 = vmul.f32 1.0, %v1363
        %v1365 = vrcp.pop %v1340
        %v1366 = vmul.f32 1.0, %v1365
        %v1367 = vrcp.pop %v1341
        %v1368 = vmul.f32 1.0, %v1367
        %v1369 = vrcp.pop %v1342
        %v1370 = vmul.f32 1.0, %v1369
        %v1371 = vrcp.pop %v1343
        %v1372 = vmul.f32 1.0, %v1371
        %v1373 = vrcp.pop %v1344
        %v1374 = vmul.f32 1.0, %v1373
        %v1375 = vrcp.pop %v1345
        %v1376 = vmul.f32 1.0, %v1375
        %v1377 = vrcp.pop %v1346
        %v1378 = vmul.f32 1.0, %v1377
        %1379 = vst [vmem:[%s356] sm:$0xff] %v1348
        %1380 = vst [vmem:[%s356 + $0x8] sm:$0xff] %v1350
        %1381 = vst [vmem:[%s356 + $0x10] sm:$0xff] %v1352
        %1382 = vst [vmem:[%s356 + $0x18] sm:$0xff] %v1354
        %1383 = vst [vmem:[%s356 + $0x20] sm:$0xff] %v1356
        %1384 = vst [vmem:[%s356 + $0x28] sm:$0xff] %v1358
        %1385 = vst [vmem:[%s356 + $0x30] sm:$0xff] %v1360
        %1386 = vst [vmem:[%s356 + $0x38] sm:$0xff] %v1362
        %1387 = vst [vmem:[%s356 + $0x40] sm:$0xff] %v1364
        %1388 = vst [vmem:[%s356 + $0x48] sm:$0xff] %v1366
        %1389 = vst [vmem:[%s356 + $0x50] sm:$0xff] %v1368
        %1390 = vst [vmem:[%s356 + $0x58] sm:$0xff] %v1370
        %1391 = vst [vmem:[%s356 + $0x60] sm:$0xff] %v1372
        %1392 = vst [vmem:[%s356 + $0x68] sm:$0xff] %v1374
        %1393 = vst [vmem:[%s356 + $0x70] sm:$0xff] %v1376
        %1394 = vst [vmem:[%s356 + $0x78] sm:$0xff] %v1378
        %s1395 = sand.u32 %s227, 1
        %s1396 = scalar_lea.sflag [#allocation4], %s1395
        %s1397 = sand.u32 %s227, 1
        %s1398 = smul.addr %s1397, 128
        %s1399 = scalar_lea.vmem [#allocation7], %s1398
        // Predicated region
        $region65: #{tpu_custom_call.1} parent=55 // pred_check
          %p1400 = pneg %p237
        $region66: #{tpu_custom_call.1} parent=55 // pred_check_branch
          %1402 = sbr.rel (%p1400) target = $region68
        $region67: #{tpu_custom_call.1} parent=55 // pred_region
          %s1403 = smul.u32 16, %s25
          %s1405 = ssub.s32 2048, 2048
          %1406 = vsyncadd %s1396, %s1405
          %s1407 = smul.addr %s1403, 128
          %s1408 = scalar_lea.hbm %s9, %s1407
          %s1409 = sshll.u32 %s1399, 4
          %s1410 = int_to_ptr.vmem [resolvable:$true] %s1409
          %1415 = dma.vmem_to_hbm [thread:$0]  %s1410, 2048, %s1408, %s1396, 128, 128, 8
        $region68: #{tpu_custom_call.1} parent=55 // pred_fallthru
          _
      $region56: #{tpu_custom_call.1} parent=5 // pred_fallthru
        _
      %p1416 = scmp.le.s32.totalorder 2, %s20
      // Predicated region
      $region69: #{tpu_custom_call.1} parent=5 // pred_check
        %p1417 = pneg %p1416
      $region70: #{tpu_custom_call.1} parent=5 // pred_check_branch
        %1419 = sbr.rel (%p1417) target = $region72
      $region71: #{tpu_custom_call.1} parent=5 // pred_region
        %s1420 = ssub.s32 %s20, 2
        // Predicated region
        $region73: #{tpu_custom_call.1} parent=71 // pred_check
          %p1421 = pneg %p243
        $region74: #{tpu_custom_call.1} parent=71 // pred_check_branch
          %1423 = sbr.rel (%p1421) target = $region76
        $region75: #{tpu_custom_call.1} parent=71 // pred_region
          %s1424 = sand.u32 %s228, 1
          %s1425 = scalar_lea.sflag [#allocation4], %s1424
          %s1426 = sand.u32 %s228, 1
          %s1427 = smul.addr %s1426, 128
          %s1428 = scalar_lea.vmem [#allocation7], %s1427
          %1429 = dma.done %s1425, 2048
        $region76: #{tpu_custom_call.1} parent=71 // pred_fallthru
          _
      $region72: #{tpu_custom_call.1} parent=5 // pred_fallthru
        _
    $region6: #{tpu_custom_call.1} parent=1 // loop_footer
      %s24 = sadd.s32 1, %s20
    $region7: #{tpu_custom_call.1} parent=1 // loop_footer_branch
      %19 = sbr.rel target = $region3
    $region8: #{tpu_custom_call.1} parent=1 // loop_exit
      _
    %1430 = vsyncpa [#allocation3], 1
    %s1431 = scalar_lea.sflag [#allocation3], 1
    %1432 = vsyncpa %s1431, 1
    %1433 = vsyncpa [#allocation6], 1
    %1434 = vsyncpa [#allocation4], 1
    %s1435 = scalar_lea.sflag [#allocation4], 1
    %1436 = vsyncpa %s1435, 1

</llo_original>
